<compile_context>
chip_gen: v6e
topology: v6e:2x2x1
jax: 0.10.0
libtpu: 0.0.40
codegen_flags: <defaults>
</compile_context>

<pallas_src>
import functools

import jax
import jax.numpy as jnp
from jax.experimental import pallas as pl
from jax.experimental.pallas import tpu as pltpu


_SMALL_SLAB_BYTES = 256 * 1024          # below this: single block, no pipelining needed
_MIN_PIPELINE_STEPS = 4                 # target grid depth for mid-sized tensors
_LANE_CANDIDATES = (2048, 1024, 512, 256, 128)


def _custom_relu_kernel(x_ref, o_ref, *, threshold):
    x = x_ref[...]
    thr = jnp.asarray(threshold, dtype=x.dtype)
    # relu(x - t) + t == max(x, t): single vmax, exact (no sub/add rounding).
    o_ref[...] = jnp.maximum(x, thr)


def _sublane_quantum(dtype) -> int:
    itemsize = jnp.dtype(dtype).itemsize
    return max(8, 32 // max(itemsize, 1))   # 8 (4B), 16 (2B), 32 (1B)


def _round_up(v: int, m: int) -> int:
    return ((v + m - 1) // m) * m


@functools.lru_cache(maxsize=1)
def _generation_tile_bytes() -> int:
    """Tile-byte target per TPU generation (bigger tiles where HBM is faster)."""
    try:
        kind = jax.devices()[0].device_kind.lower()
    except Exception:
        return 2 * 1024 * 1024
    if "v7" in kind or "7x" in kind:
        # ~3.2 TB/s per-TC HBM: 8 MiB tiles keep the 0.35 us/step overhead
        # negligible; 4 live buffers = 32 MiB, inside the 64 MiB per-TC VMEM.
        return 8 * 1024 * 1024
    if "v6" in kind:
        return 4 * 1024 * 1024          # measured ~86% of roofline vs ~85% @ 1-2 MiB
    return 2 * 1024 * 1024              # v5e: per-step overhead already fully hidden


def _lane_dense_view(flat: jax.Array, n: int):
    """Widest (rows, W) metadata-only reshape with W a multiple of 128, or None."""
    for w in _LANE_CANDIDATES:
        if n % w == 0:
            return flat.reshape(n // w, w)
    return None


def _custom_relu_2d(x2: jax.Array, threshold: float) -> jax.Array:
    rows, cols = x2.shape
    dtype = x2.dtype
    itemsize = jnp.dtype(dtype).itemsize
    q = _sublane_quantum(dtype)
    total_bytes = rows * cols * itemsize
    tile_bytes = _generation_tile_bytes()

    if total_bytes <= _SMALL_SLAB_BYTES or rows <= q:
        # Tiny slab: one block (pipelining would be pure per-step overhead).
        tr = rows
    else:
        row_bytes = cols * itemsize
        tr = max(q, (tile_bytes // row_bytes) // q * q)
        # Keep at least ~4 grid steps so input fetch / output writeback overlap.
        tr_cap = max(q, _round_up(pl.cdiv(rows, _MIN_PIPELINE_STEPS), q))
        tr = min(tr, tr_cap, _round_up(rows, q))
        if tr >= rows:
            tr = rows                   # full extent -> always a legal block shape

    grid = (pl.cdiv(rows, tr),)
    kernel = functools.partial(_custom_relu_kernel, threshold=float(threshold))

    return pl.pallas_call(
        kernel,
        out_shape=jax.ShapeDtypeStruct((rows, cols), dtype),
        grid=grid,
        in_specs=[pl.BlockSpec((tr, cols), lambda i: (i, 0))],
        out_specs=pl.BlockSpec((tr, cols), lambda i: (i, 0)),
        compiler_params=pltpu.CompilerParams(
            dimension_semantics=("parallel",),   # steps independent -> megacore on v7x
            vmem_limit_bytes=48 * 1024 * 1024,   # headroom; within v7x 64 MiB guidance
        ),
        cost_estimate=pl.CostEstimate(
            flops=rows * cols,
            transcendentals=0,
            bytes_accessed=2 * rows * cols * itemsize,
        ),
    )(x2)


def custom_relu(x: jax.Array, threshold: float = 0.0) -> jax.Array:
    """Apply CustomRelu (relu(x - threshold) + threshold) via a Pallas TPU kernel."""
    orig_shape = x.shape
    if x.size == 0:
        return x
    dtype = x.dtype
    n = x.size
    flat = x.reshape(-1)

    x2 = _lane_dense_view(flat, n)
    if x2 is not None:
        return _custom_relu_2d(x2, threshold).reshape(orig_shape)

    # Ragged element count (n % 128 != 0): lane-dense bulk + tiny scalar tail.
    thr = jnp.asarray(threshold, dtype=dtype)
    n_bulk = (n // 128) * 128
    if n_bulk == 0:
        # Fewer than 128 elements: not worth a kernel launch.
        return jnp.maximum(flat, thr).reshape(orig_shape)
    bulk2 = _lane_dense_view(flat[:n_bulk], n_bulk)
    bulk_out = _custom_relu_2d(bulk2, threshold).reshape(-1)
    tail_out = jnp.maximum(flat[n_bulk:], thr)
    return jnp.concatenate([bulk_out, tail_out]).reshape(orig_shape)


if __name__ == "__main__":
    key = jax.random.PRNGKey(0)
    k0, k1, k2, k3, k4 = jax.random.split(key, 5)
    threshold = 0.25

    # Representative small activation shape (2048 elems -> lane-dense path).
    x = jax.random.normal(k0, (2, 4, 16, 16), dtype=jnp.float32)
    y = custom_relu(x, threshold)
    jax.block_until_ready(y)
    y_ref = jnp.maximum(x - threshold, 0.0) + threshold
    assert y.shape == x.shape and y.dtype == x.dtype
    assert jnp.allclose(y, y_ref, atol=1e-6, rtol=1e-6)

    # Mid-sized tensor -> exercises the multi-step pipelined grid.
    x_m = jax.random.normal(k1, (256, 1024), dtype=jnp.float32)
    y_m = custom_relu(x_m, threshold)
    jax.block_until_ready(y_m)
    assert jnp.allclose(
        y_m, jnp.maximum(x_m - threshold, 0.0) + threshold, atol=1e-6, rtol=1e-6
    )

    # Tiny ragged element count -> pure jnp.maximum fallback.
    x_r = jax.random.normal(k2, (3, 5, 7), dtype=jnp.float32)
    y_r = custom_relu(x_r, threshold)
    jax.block_until_ready(y_r)
    assert jnp.allclose(
        y_r, jnp.maximum(x_r - threshold, 0.0) + threshold, atol=1e-6, rtol=1e-6
    )

    # Ragged with a lane-dense bulk (771 = 6*128 + 3) -> bulk kernel + tail.
    x_g = jax.random.normal(k3, (257, 3), dtype=jnp.float32)
    y_g = custom_relu(x_g, threshold)
    jax.block_until_ready(y_g)
    assert y_g.shape == x_g.shape
    assert jnp.allclose(
        y_g, jnp.maximum(x_g - threshold, 0.0) + threshold, atol=1e-6, rtol=1e-6
    )

    # bf16 path (dtype-aware sublane quantum).
    x_b = jax.random.normal(k4, (4, 8, 48), dtype=jnp.bfloat16)
    y_b = custom_relu(x_b, threshold)
    jax.block_until_ready(y_b)
    y_b_ref = jnp.maximum(x_b.astype(jnp.float32) - threshold, 0.0) + threshold
    assert y_b.dtype == x_b.dtype
    assert jnp.allclose(y_b.astype(jnp.float32), y_b_ref, atol=2e-2, rtol=2e-2)

    print("KERNEL_OK")
</pallas_src>

<mosaic_0001>
module attributes {stable_mosaic.version = 11 : i64} {
  func.func @_custom_relu_kernel(%arg0: i32, %arg1: memref<1x2048xf32, #tpu.memory_space<vmem>>, %arg2: memref<1x2048xf32, #tpu.memory_space<vmem>>) attributes {dimension_semantics = [#tpu.dimension_semantics<parallel>], iteration_bounds = array<i64: 1>, scalar_prefetch = 0 : i64, scratch_operands = 0 : i64, tpu.core_type = #tpu.core_type<tc>, window_params = [{transform_indices = @transform_0, window_bounds = array<i64: 1, 2048>}, {transform_indices = @transform_1, window_bounds = array<i64: 1, 2048>}]} {
    %c0 = arith.constant 0 : index
    %c0_0 = arith.constant 0 : index
    %0 = vector.load %arg1[%c0, %c0_0] : memref<1x2048xf32, #tpu.memory_space<vmem>>, vector<1x2048xf32>
    %cst = arith.constant 2.500000e-01 : f32
    %1 = vector.broadcast %cst : f32 to vector<1x2048xf32>
    %2 = arith.maximumf %0, %1 : vector<1x2048xf32>
    %c0_1 = arith.constant 0 : index
    %c0_2 = arith.constant 0 : index
    %3 = vector.load %arg2[%c0_1, %c0_2] : memref<1x2048xf32, #tpu.memory_space<vmem>>, vector<1x2048xf32>
    tpu.vector_store %arg2[%c0_1, %c0_2], %2 {strides = array<i32>} : memref<1x2048xf32, #tpu.memory_space<vmem>>, vector<1x2048xf32>,
    return
  }
  func.func @transform_0(%arg0: i32) -> (i32, i32) {
    %c0_i32 = arith.constant 0 : i32
    %c0_i32_0 = arith.constant 0 : i32
    return %arg0, %c0_i32 : i32, i32
  }
  func.func @transform_1(%arg0: i32) -> (i32, i32) {
    %c0_i32 = arith.constant 0 : i32
    %c0_i32_0 = arith.constant 0 : i32
    return %arg0, %c0_i32 : i32, i32
  }
}

</mosaic_0001>

<llo_original>
// kernel: tpu_custom_call.1
$region0: #{tpu_custom_call.1}
  #allocation0 [shape = 'u32[]', space=smem, size = 0x4, offset = 0x4, fixed_abs, tag = 'smem constant byte address 0x4 - core index']
  #allocation1 [shape = 'u32[144,128]{1,0:T(1,128)}', space=vmem, size = 0x12000, scoped, tag = 'internal scratch']
  %s0 = inlined_call_operand.hbm [shape: f32[1,2048], index: 0, kind: input, shape index: {}]
  %s1 = inlined_call_operand.hbm [shape: f32[1,2048], index: 1, kind: output, shape index: {}]
  %s2 = sld [smem:[#allocation0]]
  $region18: #{tpu_custom_call.1} parent=0
    _
  %s4 = ssub.s32 1, %s2
  %s5 = scalar_select 0, %s4, %s2
  $region1: #{tpu_custom_call.1} parent=0
    #allocation2 [shape = 'u8[8192]{0}', space=vmem, size = 0x2000, scoped, tag = 'input window, operand 0, single buffered']
    #allocation3 [shape = 's32[1]{0}', space=sflag, size = 0x4, scoped, tag = 'scoped memory for tpu_custom_call.1']
    #allocation4 [shape = 's32[1]{0}', space=sflag, size = 0x4, scoped, tag = 'scoped memory for tpu_custom_call.1']
    #allocation5 [shape = 'u8[8192]{0}', space=vmem, size = 0x2000, scoped, tag = 'output window, operand 0, single buffered']
    %6 = vsyncpa [#allocation3], 0
    %7 = vsyncpa [#allocation4], 0
    // Predicated region
    $region2: #{tpu_custom_call.1} parent=1 // pred_check
      _
    $region3: #{tpu_custom_call.1} parent=1 // pred_check_branch
      %9 = sbr.rel (0) target = $region5
    $region4: #{tpu_custom_call.1} parent=1 // pred_region
      %s11 = ssub.s32 256, 256
      %12 = vsyncadd [#allocation3], %s11
      %s14 = sshll.u32 [#allocation2], 4
      %s15 = int_to_ptr.vmem [resolvable:$true] %s14
      %17 = dma.hbm_to_vmem [thread:$0]  %s0, 256, %s15, [#allocation3]
    $region5: #{tpu_custom_call.1} parent=1 // pred_fallthru
      _
    // Predicated region
    $region6: #{tpu_custom_call.1} parent=1 // pred_check
      _
    $region7: #{tpu_custom_call.1} parent=1 // pred_check_branch
      %19 = sbr.rel (0) target = $region9
    $region8: #{tpu_custom_call.1} parent=1 // pred_region
      %20 = dma.done [#allocation3], 256
    $region9: #{tpu_custom_call.1} parent=1 // pred_fallthru
      _
    %v21 = vld [vmem:[#allocation2] sm:$0xff]
    %v22 = vld [vmem:[#allocation2 + $0x8] sm:$0xff]
    %v23 = vmax.f32 %v21, 0.25
    %v24 = vmax.f32 %v22, 0.25
    %25 = vst [vmem:[#allocation5] sm:$0xff] %v23
    %26 = vst [vmem:[#allocation5 + $0x8] sm:$0xff] %v24
    // Predicated region
    $region10: #{tpu_custom_call.1} parent=1 // pred_check
      _
    $region11: #{tpu_custom_call.1} parent=1 // pred_check_branch
      %28 = sbr.rel (0) target = $region13
    $region12: #{tpu_custom_call.1} parent=1 // pred_region
      %s30 = ssub.s32 256, 256
      %31 = vsyncadd [#allocation4], %s30
      %s33 = sshll.u32 [#allocation5], 4
      %s34 = int_to_ptr.vmem [resolvable:$true] %s33
      %36 = dma.vmem_to_hbm [thread:$0]  %s34, 256, %s1, [#allocation4]
    $region13: #{tpu_custom_call.1} parent=1 // pred_fallthru
      _
    // Predicated region
    $region14: #{tpu_custom_call.1} parent=1 // pred_check
      _
    $region15: #{tpu_custom_call.1} parent=1 // pred_check_branch
      %38 = sbr.rel (0) target = $region17
    $region16: #{tpu_custom_call.1} parent=1 // pred_region
      %39 = dma.done [#allocation4], 256
    $region17: #{tpu_custom_call.1} parent=1 // pred_fallthru
      _
    %40 = vsyncpa [#allocation3], 1
    %41 = vsyncpa [#allocation4], 1

</llo_original>
